<compile_context>
chip_gen: v7x
topology: tpu7x:2x2x1
jax: 0.10.0
libtpu: 0.0.40
codegen_flags: <defaults>
</compile_context>

<pallas_src>
import functools

import jax
import jax.numpy as jnp
from jax.experimental import pallas as pl
from jax.experimental.pallas import tpu as pltpu


def _lstm_recurrence_kernel(pg_ref, whh_ref, h0_ref, out_ref, h_scr, c_scr,
                            *, hidden_size, t_block, apply_sigmoid):
    """Recurrent part of one LSTM layer over a block of `t_block` timesteps.

    pg_ref  : (t_block, B, 4H)  precomputed x_t @ W_ih^T + (b_ih + b_hh), time-major
    whh_ref : (H, 4H)           W_hh^T (VMEM-resident, constant index_map)
    h0_ref  : (B, H)            initial hidden state for this layer
    out_ref : (t_block, B, H)   h_t (sigmoid applied on the last layer)
    h_scr   : (B, H) f32        hidden-state carry across time-block grid steps
    c_scr   : (B, H) f32        cell-state carry across time-block grid steps
    """
    tb = pl.program_id(0)

    @pl.when(tb == 0)
    def _():
        h_scr[...] = h0_ref[...].astype(jnp.float32)
        # c_0 = 0, matching `ini_cell_state = torch.zeros(...)` in the module.
        c_scr[...] = jnp.zeros_like(c_scr)

    H = hidden_size
    w_hh = whh_ref[...]            # hoisted out of the time loop

    def step(tt, carry):
        h_prev, c_prev = carry
        # Only the recurrent matmul remains on the serial critical path.
        gates = pg_ref[tt].astype(jnp.float32) + jnp.dot(
            h_prev, w_hh, preferred_element_type=jnp.float32)     # (B, 4H)

        # Two full-width EUP passes instead of four quarter-width ones.
        sig = jax.nn.sigmoid(gates)
        tnh = jnp.tanh(gates)
        i_g = sig[:, 0 * H:1 * H]
        f_g = sig[:, 1 * H:2 * H]
        o_g = sig[:, 3 * H:4 * H]
        g_g = tnh[:, 2 * H:3 * H]

        c_t = f_g * c_prev + i_g * g_g
        h_t = o_g * jnp.tanh(c_t)

        y = jax.nn.sigmoid(h_t) if apply_sigmoid else h_t
        out_ref[tt] = y.astype(out_ref.dtype)   # store into the VMEM slab;
        return h_t, c_t                         # HBM writeback once per block

    h_fin, c_fin = jax.lax.fori_loop(
        0, t_block, step, (h_scr[...], c_scr[...]),
        unroll=(t_block <= 16))
    h_scr[...] = h_fin
    c_scr[...] = c_fin


def lstm_recurrence(pre_gates_tm, w_hh_t, h0, *, apply_sigmoid, t_block=128):
    """Run one layer's recurrence. pre_gates_tm is (T, B, 4H) time-major;
    returns h sequence (T, B, H) time-major (sigmoid'd if apply_sigmoid)."""
    T, B, G = pre_gates_tm.shape
    H = h0.shape[-1]
    assert G == 4 * H

    if T <= t_block:
        blk, T_pad = T, T
    else:
        blk = t_block
        T_pad = -(-T // blk) * blk
        if T_pad != T:
            # Padded trailing steps produce junk h that is sliced off below.
            pre_gates_tm = jnp.pad(pre_gates_tm,
                                   ((0, T_pad - T), (0, 0), (0, 0)))
    n_blocks = T_pad // blk

    kernel = functools.partial(_lstm_recurrence_kernel, hidden_size=H,
                               t_block=blk, apply_sigmoid=apply_sigmoid)

    out = pl.pallas_call(
        kernel,
        out_shape=jax.ShapeDtypeStruct((T_pad, B, H), jnp.float32),
        grid=(n_blocks,),
        in_specs=[
            pl.BlockSpec((blk, B, G), lambda i: (i, 0, 0)),   # pre-gates block
            pl.BlockSpec((H, G), lambda i: (0, 0)),           # W_hh^T (resident)
            pl.BlockSpec((B, H), lambda i: (0, 0)),           # h0
        ],
        out_specs=pl.BlockSpec((blk, B, H), lambda i: (i, 0, 0)),
        scratch_shapes=[
            pltpu.VMEM((B, H), jnp.float32),   # h carry
            pltpu.VMEM((B, H), jnp.float32),   # c carry
        ],
        compiler_params=pltpu.CompilerParams(
            dimension_semantics=("arbitrary",),        # time is serial
            vmem_limit_bytes=64 * 1024 * 1024),
    )(pre_gates_tm, w_hh_t, h0)

    return out[:T] if T_pad != T else out


def init_lstm_params(key, input_size, hidden_size, num_layers,
                     weight_dtype=jnp.float32):
    """PyTorch-style init U(-1/sqrt(H), 1/sqrt(H)). Weights stored transposed:
    W_ih^T (D_in, 4H), W_hh^T (H, 4H), combined bias (1, 4H).
    For production on v6e/v7x pass weight_dtype=jnp.bfloat16 (halves weight
    VMEM/DMA); keep f32 on v5e (no bf16 VPU/EUP) and for this demo's tolerance."""
    params = []
    bound = 1.0 / jnp.sqrt(jnp.float32(hidden_size))
    for layer in range(num_layers):
        d_in = input_size if layer == 0 else hidden_size
        key, k1, k2, k3, k4 = jax.random.split(key, 5)
        w_ih = jax.random.uniform(k1, (4 * hidden_size, d_in),
                                  jnp.float32, -bound, bound)
        w_hh = jax.random.uniform(k2, (4 * hidden_size, hidden_size),
                                  jnp.float32, -bound, bound)
        b_ih = jax.random.uniform(k3, (4 * hidden_size,),
                                  jnp.float32, -bound, bound)
        b_hh = jax.random.uniform(k4, (4 * hidden_size,),
                                  jnp.float32, -bound, bound)
        params.append({
            "w_ih_t": w_ih.T.astype(weight_dtype),       # (D_in, 4H)
            "w_hh_t": w_hh.T.astype(weight_dtype),       # (H, 4H)
            "b": (b_ih + b_hh).reshape(1, -1),           # (1, 4H), f32
        })
    return params


def hazard_rate_lstm_forward(params, data, ini_hidden_state, *, t_block=128):
    """Equivalent of HazardRate_LSTM.forward (eval-mode dropout)."""
    num_layers = len(params)
    x_tm = jnp.transpose(data, (1, 0, 2))          # time-major (T, B, D)
    for layer, p in enumerate(params):
        # Hoisted input projection: one big matmul over ALL timesteps
        # (MXU-efficient, off the serial critical path), bias folded in.
        pre = jnp.einsum('tbd,dg->tbg', x_tm, p["w_ih_t"],
                         preferred_element_type=jnp.float32) + p["b"]
        x_tm = lstm_recurrence(pre, p["w_hh_t"], ini_hidden_state[layer],
                               apply_sigmoid=(layer == num_layers - 1),
                               t_block=t_block)
    return jnp.transpose(x_tm, (1, 0, 2))          # back to (B, T, H)


def _reference_forward(params, data, ini_hidden_state):
    """Pure-JAX reference (lax.scan) for correctness checking."""
    x = data
    num_layers = len(params)
    for layer, p in enumerate(params):
        H = p["w_hh_t"].shape[0]
        h0 = ini_hidden_state[layer]
        c0 = jnp.zeros_like(h0)

        def step(carry, x_t, p=p, H=H):
            h, c = carry
            gates = (x_t @ p["w_ih_t"].astype(jnp.float32)
                     + h @ p["w_hh_t"].astype(jnp.float32) + p["b"])
            i = jax.nn.sigmoid(gates[:, 0 * H:1 * H])
            f = jax.nn.sigmoid(gates[:, 1 * H:2 * H])
            g = jnp.tanh(gates[:, 2 * H:3 * H])
            o = jax.nn.sigmoid(gates[:, 3 * H:4 * H])
            c_t = f * c + i * g
            h_t = o * jnp.tanh(c_t)
            return (h_t, c_t), h_t

        _, ys = jax.lax.scan(step, (h0, c0), jnp.swapaxes(x, 0, 1))
        x = jnp.swapaxes(ys, 0, 1)
        if layer == num_layers - 1:
            x = jax.nn.sigmoid(x)
    return x


if __name__ == "__main__":
    # Small shapes consistent with the module's forward:
    #   data: (batch, seq, input_size), ini_hidden_state: (num_layers, batch, hidden)
    batch, seq, input_size, hidden_size, num_layers = 2, 8, 4, 32, 2
    dropout_prob = 0.1  # unused in eval-mode forward

    key = jax.random.PRNGKey(0)
    k_params, k_data, k_h0 = jax.random.split(key, 3)

    params = init_lstm_params(k_params, input_size, hidden_size, num_layers)
    data = jax.random.normal(k_data, (batch, seq, input_size), jnp.float32)
    ini_hidden_state = jax.random.normal(
        k_h0, (num_layers, batch, hidden_size), jnp.float32)

    # t_block=4 here so the demo exercises the multi-block path (grid > 1) and
    # the h/c VMEM carries; production default is t_block=128.
    out = hazard_rate_lstm_forward(params, data, ini_hidden_state, t_block=4)
    out = jax.block_until_ready(out)

    ref = _reference_forward(params, data, ini_hidden_state)
    assert out.shape == (batch, seq, hidden_size)
    assert jnp.max(jnp.abs(out - ref)) < 1e-4, "mismatch vs. JAX reference"

    print("KERNEL_OK")
</pallas_src>

<mosaic_0001>
module attributes {stable_mosaic.version = 11 : i64} {
  func.func @_lstm_recurrence_kernel(%arg0: i32, %arg1: memref<4x2x128xf32, #tpu.memory_space<vmem>>, %arg2: memref<32x128xf32, #tpu.memory_space<vmem>>, %arg3: memref<2x32xf32, #tpu.memory_space<vmem>>, %arg4: memref<4x2x32xf32, #tpu.memory_space<vmem>>, %arg5: memref<2x32xf32, #tpu.memory_space<vmem>>, %arg6: memref<2x32xf32, #tpu.memory_space<vmem>>) attributes {dimension_semantics = [#tpu.dimension_semantics<arbitrary>], iteration_bounds = array<i64: 2>, scalar_prefetch = 0 : i64, scratch_operands = 2 : i64, tpu.core_type = #tpu.core_type<tc>, window_params = [{transform_indices = @transform_0, window_bounds = array<i64: 4, 2, 128>}, {pipeline_mode = #tpu.pipeline_mode<synchronous>, transform_indices = @transform_1, window_bounds = array<i64: 32, 128>}, {pipeline_mode = #tpu.pipeline_mode<synchronous>, transform_indices = @transform_2, window_bounds = array<i64: 2, 32>}, {transform_indices = @transform_3, window_bounds = array<i64: 4, 2, 32>}]} {
    %c0_i32 = arith.constant 0 : i32
    %0 = arith.cmpi eq, %arg0, %c0_i32 : i32
    %1 = arith.extui %0 : i1 to i32
    %c0_i32_0 = arith.constant 0 : i32
    %2 = arith.cmpi ne, %1, %c0_i32_0 : i32
    scf.if %2 {
      %c0_34 = arith.constant 0 : index
      %c0_35 = arith.constant 0 : index
      %104 = vector.load %arg3[%c0_34, %c0_35] : memref<2x32xf32, #tpu.memory_space<vmem>>, vector<2x32xf32>
      %c0_36 = arith.constant 0 : index
      %c0_37 = arith.constant 0 : index
      %105 = vector.load %arg5[%c0_36, %c0_37] : memref<2x32xf32, #tpu.memory_space<vmem>>, vector<2x32xf32>
      tpu.vector_store %arg5[%c0_36, %c0_37], %104 {strides = array<i32>} : memref<2x32xf32, #tpu.memory_space<vmem>>, vector<2x32xf32>,
      %cst_38 = arith.constant 0.000000e+00 : f32
      %106 = vector.broadcast %cst_38 : f32 to vector<2x32xf32>
      %c0_39 = arith.constant 0 : index
      %c0_40 = arith.constant 0 : index
      %107 = vector.load %arg6[%c0_39, %c0_40] : memref<2x32xf32, #tpu.memory_space<vmem>>, vector<2x32xf32>
      tpu.vector_store %arg6[%c0_39, %c0_40], %106 {strides = array<i32>} : memref<2x32xf32, #tpu.memory_space<vmem>>, vector<2x32xf32>,
    } else {
    }
    %c0 = arith.constant 0 : index
    %c0_1 = arith.constant 0 : index
    %3 = vector.load %arg2[%c0, %c0_1] : memref<32x128xf32, #tpu.memory_space<vmem>>, vector<32x128xf32>
    %c0_2 = arith.constant 0 : index
    %c0_3 = arith.constant 0 : index
    %4 = vector.load %arg5[%c0_2, %c0_3] : memref<2x32xf32, #tpu.memory_space<vmem>>, vector<2x32xf32>
    %c0_4 = arith.constant 0 : index
    %c0_5 = arith.constant 0 : index
    %5 = vector.load %arg6[%c0_4, %c0_5] : memref<2x32xf32, #tpu.memory_space<vmem>>, vector<2x32xf32>
    %c0_i32_6 = arith.constant 0 : i32
    %6 = arith.index_cast %c0_i32_6 : i32 to index
    %c0_7 = arith.constant 0 : index
    %c0_8 = arith.constant 0 : index
    %7 = vector.load %arg1[%6, %c0_7, %c0_8] : memref<4x2x128xf32, #tpu.memory_space<vmem>>, vector<1x2x128xf32>
    %8 = vector.shape_cast %7 : vector<1x2x128xf32> to vector<2x128xf32>
    %cst = arith.constant dense<0.000000e+00> : vector<2x128xf32>
    %9 = tpu.matmul %4, %3, %cst {dimension_numbers = #tpu.dot_dimension_numbers<[1], [0], [0], [1], [0, 0, 1, 1], [], []>} : vector<2x32xf32>, vector<32x128xf32>, vector<2x128xf32> -> vector<2x128xf32>
    %10 = arith.addf %8, %9 : vector<2x128xf32>
    %11 = arith.negf %10 : vector<2x128xf32>
    %12 = math.exp %11 : vector<2x128xf32>
    %cst_9 = arith.constant 1.000000e+00 : f32
    %13 = vector.broadcast %cst_9 : f32 to vector<2x128xf32>
    %14 = arith.addf %13, %12 : vector<2x128xf32>
    %15 = arith.divf %13, %14 : vector<2x128xf32>
    %16 = math.tanh %10 : vector<2x128xf32>
    %17 = vector.extract_strided_slice %15 {offsets = [0, 0], sizes = [2, 32], strides = [1, 1]} : vector<2x128xf32> to vector<2x32xf32>
    %18 = vector.extract_strided_slice %15 {offsets = [0, 32], sizes = [2, 32], strides = [1, 1]} : vector<2x128xf32> to vector<2x32xf32>
    %19 = vector.extract_strided_slice %15 {offsets = [0, 96], sizes = [2, 32], strides = [1, 1]} : vector<2x128xf32> to vector<2x32xf32>
    %20 = vector.extract_strided_slice %16 {offsets = [0, 64], sizes = [2, 32], strides = [1, 1]} : vector<2x128xf32> to vector<2x32xf32>
    %21 = arith.mulf %18, %5 : vector<2x32xf32>
    %22 = arith.mulf %17, %20 : vector<2x32xf32>
    %23 = arith.addf %21, %22 : vector<2x32xf32>
    %24 = math.tanh %23 : vector<2x32xf32>
    %25 = arith.mulf %19, %24 : vector<2x32xf32>
    %26 = arith.index_cast %c0_i32_6 : i32 to index
    %c0_10 = arith.constant 0 : index
    %c0_11 = arith.constant 0 : index
    %27 = vector.load %arg4[%26, %c0_10, %c0_11] : memref<4x2x32xf32, #tpu.memory_space<vmem>>, vector<1x2x32xf32>
    %28 = vector.shape_cast %27 : vector<1x2x32xf32> to vector<2x32xf32>
    %29 = vector.shape_cast %25 : vector<2x32xf32> to vector<1x2x32xf32>
    tpu.vector_store %arg4[%26, %c0_10, %c0_11], %29 {strides = array<i32>} : memref<4x2x32xf32, #tpu.memory_space<vmem>>, vector<1x2x32xf32>,
    %c1_i32 = arith.constant 1 : i32
    %30 = arith.index_cast %c1_i32 : i32 to index
    %c0_12 = arith.constant 0 : index
    %c0_13 = arith.constant 0 : index
    %31 = vector.load %arg1[%30, %c0_12, %c0_13] : memref<4x2x128xf32, #tpu.memory_space<vmem>>, vector<1x2x128xf32>
    %32 = vector.shape_cast %31 : vector<1x2x128xf32> to vector<2x128xf32>
    %cst_14 = arith.constant dense<0.000000e+00> : vector<2x128xf32>
    %33 = tpu.matmul %25, %3, %cst_14 {dimension_numbers = #tpu.dot_dimension_numbers<[1], [0], [0], [1], [0, 0, 1, 1], [], []>} : vector<2x32xf32>, vector<32x128xf32>, vector<2x128xf32> -> vector<2x128xf32>
    %34 = arith.addf %32, %33 : vector<2x128xf32>
    %35 = arith.negf %34 : vector<2x128xf32>
    %36 = math.exp %35 : vector<2x128xf32>
    %cst_15 = arith.constant 1.000000e+00 : f32
    %37 = vector.broadcast %cst_15 : f32 to vector<2x128xf32>
    %38 = arith.addf %37, %36 : vector<2x128xf32>
    %39 = arith.divf %37, %38 : vector<2x128xf32>
    %40 = math.tanh %34 : vector<2x128xf32>
    %41 = vector.extract_strided_slice %39 {offsets = [0, 0], sizes = [2, 32], strides = [1, 1]} : vector<2x128xf32> to vector<2x32xf32>
    %42 = vector.extract_strided_slice %39 {offsets = [0, 32], sizes = [2, 32], strides = [1, 1]} : vector<2x128xf32> to vector<2x32xf32>
    %43 = vector.extract_strided_slice %39 {offsets = [0, 96], sizes = [2, 32], strides = [1, 1]} : vector<2x128xf32> to vector<2x32xf32>
    %44 = vector.extract_strided_slice %40 {offsets = [0, 64], sizes = [2, 32], strides = [1, 1]} : vector<2x128xf32> to vector<2x32xf32>
    %45 = arith.mulf %42, %23 : vector<2x32xf32>
    %46 = arith.mulf %41, %44 : vector<2x32xf32>
    %47 = arith.addf %45, %46 : vector<2x32xf32>
    %48 = math.tanh %47 : vector<2x32xf32>
    %49 = arith.mulf %43, %48 : vector<2x32xf32>
    %50 = arith.index_cast %c1_i32 : i32 to index
    %c0_16 = arith.constant 0 : index
    %c0_17 = arith.constant 0 : index
    %51 = vector.load %arg4[%50, %c0_16, %c0_17] : memref<4x2x32xf32, #tpu.memory_space<vmem>>, vector<1x2x32xf32>
    %52 = vector.shape_cast %51 : vector<1x2x32xf32> to vector<2x32xf32>
    %53 = vector.shape_cast %49 : vector<2x32xf32> to vector<1x2x32xf32>
    tpu.vector_store %arg4[%50, %c0_16, %c0_17], %53 {strides = array<i32>} : memref<4x2x32xf32, #tpu.memory_space<vmem>>, vector<1x2x32xf32>,
    %c2_i32 = arith.constant 2 : i32
    %54 = arith.index_cast %c2_i32 : i32 to index
    %c0_18 = arith.constant 0 : index
    %c0_19 = arith.constant 0 : index
    %55 = vector.load %arg1[%54, %c0_18, %c0_19] : memref<4x2x128xf32, #tpu.memory_space<vmem>>, vector<1x2x128xf32>
    %56 = vector.shape_cast %55 : vector<1x2x128xf32> to vector<2x128xf32>
    %cst_20 = arith.constant dense<0.000000e+00> : vector<2x128xf32>
    %57 = tpu.matmul %49, %3, %cst_20 {dimension_numbers = #tpu.dot_dimension_numbers<[1], [0], [0], [1], [0, 0, 1, 1], [], []>} : vector<2x32xf32>, vector<32x128xf32>, vector<2x128xf32> -> vector<2x128xf32>
    %58 = arith.addf %56, %57 : vector<2x128xf32>
    %59 = arith.negf %58 : vector<2x128xf32>
    %60 = math.exp %59 : vector<2x128xf32>
    %cst_21 = arith.constant 1.000000e+00 : f32
    %61 = vector.broadcast %cst_21 : f32 to vector<2x128xf32>
    %62 = arith.addf %61, %60 : vector<2x128xf32>
    %63 = arith.divf %61, %62 : vector<2x128xf32>
    %64 = math.tanh %58 : vector<2x128xf32>
    %65 = vector.extract_strided_slice %63 {offsets = [0, 0], sizes = [2, 32], strides = [1, 1]} : vector<2x128xf32> to vector<2x32xf32>
    %66 = vector.extract_strided_slice %63 {offsets = [0, 32], sizes = [2, 32], strides = [1, 1]} : vector<2x128xf32> to vector<2x32xf32>
    %67 = vector.extract_strided_slice %63 {offsets = [0, 96], sizes = [2, 32], strides = [1, 1]} : vector<2x128xf32> to vector<2x32xf32>
    %68 = vector.extract_strided_slice %64 {offsets = [0, 64], sizes = [2, 32], strides = [1, 1]} : vector<2x128xf32> to vector<2x32xf32>
    %69 = arith.mulf %66, %47 : vector<2x32xf32>
    %70 = arith.mulf %65, %68 : vector<2x32xf32>
    %71 = arith.addf %69, %70 : vector<2x32xf32>
    %72 = math.tanh %71 : vector<2x32xf32>
    %73 = arith.mulf %67, %72 : vector<2x32xf32>
    %74 = arith.index_cast %c2_i32 : i32 to index
    %c0_22 = arith.constant 0 : index
    %c0_23 = arith.constant 0 : index
    %75 = vector.load %arg4[%74, %c0_22, %c0_23] : memref<4x2x32xf32, #tpu.memory_space<vmem>>, vector<1x2x32xf32>
    %76 = vector.shape_cast %75 : vector<1x2x32xf32> to vector<2x32xf32>
    %77 = vector.shape_cast %73 : vector<2x32xf32> to vector<1x2x32xf32>
    tpu.vector_store %arg4[%74, %c0_22, %c0_23], %77 {strides = array<i32>} : memref<4x2x32xf32, #tpu.memory_space<vmem>>, vector<1x2x32xf32>,
    %c3_i32 = arith.constant 3 : i32
    %78 = arith.index_cast %c3_i32 : i32 to index
    %c0_24 = arith.constant 0 : index
    %c0_25 = arith.constant 0 : index
    %79 = vector.load %arg1[%78, %c0_24, %c0_25] : memref<4x2x128xf32, #tpu.memory_space<vmem>>, vector<1x2x128xf32>
    %80 = vector.shape_cast %79 : vector<1x2x128xf32> to vector<2x128xf32>
    %cst_26 = arith.constant dense<0.000000e+00> : vector<2x128xf32>
    %81 = tpu.matmul %73, %3, %cst_26 {dimension_numbers = #tpu.dot_dimension_numbers<[1], [0], [0], [1], [0, 0, 1, 1], [], []>} : vector<2x32xf32>, vector<32x128xf32>, vector<2x128xf32> -> vector<2x128xf32>
    %82 = arith.addf %80, %81 : vector<2x128xf32>
    %83 = arith.negf %82 : vector<2x128xf32>
    %84 = math.exp %83 : vector<2x128xf32>
    %cst_27 = arith.constant 1.000000e+00 : f32
    %85 = vector.broadcast %cst_27 : f32 to vector<2x128xf32>
    %86 = arith.addf %85, %84 : vector<2x128xf32>
    %87 = arith.divf %85, %86 : vector<2x128xf32>
    %88 = math.tanh %82 : vector<2x128xf32>
    %89 = vector.extract_strided_slice %87 {offsets = [0, 0], sizes = [2, 32], strides = [1, 1]} : vector<2x128xf32> to vector<2x32xf32>
    %90 = vector.extract_strided_slice %87 {offsets = [0, 32], sizes = [2, 32], strides = [1, 1]} : vector<2x128xf32> to vector<2x32xf32>
    %91 = vector.extract_strided_slice %87 {offsets = [0, 96], sizes = [2, 32], strides = [1, 1]} : vector<2x128xf32> to vector<2x32xf32>
    %92 = vector.extract_strided_slice %88 {offsets = [0, 64], sizes = [2, 32], strides = [1, 1]} : vector<2x128xf32> to vector<2x32xf32>
    %93 = arith.mulf %90, %71 : vector<2x32xf32>
    %94 = arith.mulf %89, %92 : vector<2x32xf32>
    %95 = arith.addf %93, %94 : vector<2x32xf32>
    %96 = math.tanh %95 : vector<2x32xf32>
    %97 = arith.mulf %91, %96 : vector<2x32xf32>
    %98 = arith.index_cast %c3_i32 : i32 to index
    %c0_28 = arith.constant 0 : index
    %c0_29 = arith.constant 0 : index
    %99 = vector.load %arg4[%98, %c0_28, %c0_29] : memref<4x2x32xf32, #tpu.memory_space<vmem>>, vector<1x2x32xf32>
    %100 = vector.shape_cast %99 : vector<1x2x32xf32> to vector<2x32xf32>
    %101 = vector.shape_cast %97 : vector<2x32xf32> to vector<1x2x32xf32>
    tpu.vector_store %arg4[%98, %c0_28, %c0_29], %101 {strides = array<i32>} : memref<4x2x32xf32, #tpu.memory_space<vmem>>, vector<1x2x32xf32>,
    %c4_i32 = arith.constant 4 : i32
    %c0_30 = arith.constant 0 : index
    %c0_31 = arith.constant 0 : index
    %102 = vector.load %arg5[%c0_30, %c0_31] : memref<2x32xf32, #tpu.memory_space<vmem>>, vector<2x32xf32>
    tpu.vector_store %arg5[%c0_30, %c0_31], %97 {strides = array<i32>} : memref<2x32xf32, #tpu.memory_space<vmem>>, vector<2x32xf32>,
    %c0_32 = arith.constant 0 : index
    %c0_33 = arith.constant 0 : index
    %103 = vector.load %arg6[%c0_32, %c0_33] : memref<2x32xf32, #tpu.memory_space<vmem>>, vector<2x32xf32>
    tpu.vector_store %arg6[%c0_32, %c0_33], %95 {strides = array<i32>} : memref<2x32xf32, #tpu.memory_space<vmem>>, vector<2x32xf32>,
    return
  }
  func.func @transform_0(%arg0: i32) -> (i32, i32, i32) {
    %c0_i32 = arith.constant 0 : i32
    %c0_i32_0 = arith.constant 0 : i32
    %c0_i32_1 = arith.constant 0 : i32
    return %arg0, %c0_i32, %c0_i32_0 : i32, i32, i32
  }
  func.func @transform_1(%arg0: i32) -> (i32, i32) {
    %c0_i32 = arith.constant 0 : i32
    %c0_i32_0 = arith.constant 0 : i32
    %c0_i32_1 = arith.constant 0 : i32
    return %c0_i32, %c0_i32_0 : i32, i32
  }
  func.func @transform_2(%arg0: i32) -> (i32, i32) {
    %c0_i32 = arith.constant 0 : i32
    %c0_i32_0 = arith.constant 0 : i32
    %c0_i32_1 = arith.constant 0 : i32
    return %c0_i32, %c0_i32_0 : i32, i32
  }
  func.func @transform_3(%arg0: i32) -> (i32, i32, i32) {
    %c0_i32 = arith.constant 0 : i32
    %c0_i32_0 = arith.constant 0 : i32
    %c0_i32_1 = arith.constant 0 : i32
    return %arg0, %c0_i32, %c0_i32_0 : i32, i32, i32
  }
}

</mosaic_0001>

<llo_original>
// kernel: tpu_custom_call.1
$region0: #{tpu_custom_call.1}
  #allocation0 [shape = 'u32[]', space=smem, size = 0x4, offset = 0x4, fixed_abs, tag = 'smem constant byte address 0x4 - core index']
  #allocation1 [shape = 'u32[144,128]{1,0:T(1,128)}', space=vmem, size = 0x12000, scoped, tag = 'internal scratch']
  #allocation2 [shape = 'f32[2,32]{1,0:T(2,128)}', space=vmem, size = 0x400, scoped, tag = 'scratch operand']
  #allocation3 [shape = 'f32[2,32]{1,0:T(2,128)}', space=vmem, size = 0x400, scoped, tag = 'scratch operand']
  %s0 = inlined_call_operand.hbm [shape: f32[8,2,128], index: 0, kind: input, shape index: {}]
  %s1 = inlined_call_operand.hbm [shape: f32[32,128], index: 1, kind: input, shape index: {}]
  %s2 = inlined_call_operand.hbm [shape: f32[2,32], index: 2, kind: input, shape index: {}]
  %s3 = inlined_call_operand.hbm [shape: f32[8,2,32], index: 3, kind: output, shape index: {}]
  %s4 = sld [smem:[#allocation0]]
  $region61: #{tpu_custom_call.1} parent=0
    _
  %s6 = ssub.s32 1, %s4
  %s7 = scalar_select 0, %s6, %s4
  $region1: #{tpu_custom_call.1} parent=0
    #allocation4 [shape = 'u8[8192]{0}', space=vmem, size = 0x2000, scoped, tag = 'input window, operand 0']
    #allocation5 [shape = 's32[2]{0}', space=sflag, size = 0x8, scoped, tag = 'scoped memory for tpu_custom_call.1']
    #allocation6 [shape = 's32[2]{0}', space=sflag, size = 0x8, scoped, tag = 'scoped memory for tpu_custom_call.1']
    #allocation7 [shape = 'u8[16384]{0}', space=vmem, size = 0x4000, scoped, tag = 'input window, operand 1, single buffered']
    #allocation8 [shape = 's32[1]{0}', space=sflag, size = 0x4, scoped, tag = 'scoped memory for tpu_custom_call.1']
    #allocation9 [shape = 'u8[1024]{0}', space=vmem, size = 0x400, scoped, tag = 'input window, operand 2, single buffered']
    #allocation10 [shape = 'u8[8192]{0}', space=vmem, size = 0x2000, scoped, tag = 'output window, operand 0']
    %8 = vsyncpa [#allocation5], 0
    %s9 = scalar_lea.sflag [#allocation5], 1
    %10 = vsyncpa %s9, 0
    %11 = vsyncpa [#allocation8], 0
    %12 = vsyncpa [#allocation6], 0
    %s13 = scalar_lea.sflag [#allocation6], 1
    %14 = vsyncpa %s13, 0
    loop: start=0, step=1, limit=4
    $region2: #{tpu_custom_call.1} parent=1 // loop_pre_header
      _
    $region3: #{tpu_custom_call.1} parent=1 // loop_header
      %s16 = sphi 0, %s20
      %p17 = scmp.ge.s32.totalorder %s16, 4
      %s26 = sphi 0, %s28
      %s29 = sphi 0, %s26
      %s30 = sphi 0, %s29
      %s46 = sphi 0, %s30
      %s50 = sphi 0, %s50
      %s52 = sphi 0, %s50
      %s53 = sphi 0, %s52
      %s67 = sphi 0, %s53
      %s71 = sphi 0, %s71
      %s73 = sphi 0, %s71
      %s74 = sphi 0, %s73
      %s88 = sphi 0, %s74
      %s94 = sphi 0, %s96
      %s97 = sphi 0, %s94
      %s98 = sphi 0, %s97
      %s114 = sphi 0, %s98
    $region4: #{tpu_custom_call.1} parent=1 // loop_header_branch
      %19 = sbr.rel (%p17) target = $region8
    $region5: #{tpu_custom_call.1} parent=1 // loop_body
      %s21 = ssub.s32 %s16, 1
      %s22 = ssub.s32 %s16, 2
      %s23 = sadd.s32 %s16, 1
      %s24 = ssub.s32 %s16, %s23
      %p25 = scmp.eq.s32.totalorder %s24, 0
      %s27 = sadd.s32 %s26, 1
      %s28 = scalar_select %p25, %s26, %s27
      %p31 = pneg %p25
      %p32 = scmp.eq.s32.totalorder %s16, 1
      %p33 = por %p31, %p32
      %p34 = scmp.ne.s32.totalorder %s26, %s29
      %p35 = scmp.eq.s32.totalorder %s16, 0
      %p36 = por %p34, %p35
      %p37 = scmp.ne.s32.totalorder %s26, %s29
      %p38 = scmp.eq.s32.totalorder %s21, 1
      %p39 = por %p37, %p38
      %p40 = scmp.ne.s32.totalorder %s29, %s30
      %p41 = scmp.eq.s32.totalorder %s21, 0
      %p42 = por %p40, %p41
      %p43 = scmp.ne.s32.totalorder %s29, %s30
      %p44 = scmp.eq.s32.totalorder %s22, 1
      %p45 = por %p43, %p44
      %p47 = scmp.ne.s32.totalorder %s30, %s46
      %p48 = scmp.eq.s32.totalorder %s22, 0
      %p49 = por %p47, %p48
      %s51 = sadd.s32 %s50, 1
      %p54 = scmp.eq.s32.totalorder %s16, 1
      %p55 = scmp.ne.s32.totalorder %s50, %s52
      %p56 = scmp.eq.s32.totalorder %s16, 0
      %p57 = por %p55, %p56
      %p58 = scmp.ne.s32.totalorder %s50, %s52
      %p59 = scmp.eq.s32.totalorder %s21, 1
      %p60 = por %p58, %p59
      %p61 = scmp.ne.s32.totalorder %s52, %s53
      %p62 = scmp.eq.s32.totalorder %s21, 0
      %p63 = por %p61, %p62
      %p64 = scmp.ne.s32.totalorder %s52, %s53
      %p65 = scmp.eq.s32.totalorder %s22, 1
      %p66 = por %p64, %p65
      %p68 = scmp.ne.s32.totalorder %s53, %s67
      %p69 = scmp.eq.s32.totalorder %s22, 0
      %p70 = por %p68, %p69
      %s72 = sadd.s32 %s71, 1
      %p75 = scmp.eq.s32.totalorder %s16, 1
      %p76 = scmp.ne.s32.totalorder %s71, %s73
      %p77 = scmp.eq.s32.totalorder %s16, 0
      %p78 = por %p76, %p77
      %p79 = scmp.ne.s32.totalorder %s71, %s73
      %p80 = scmp.eq.s32.totalorder %s21, 1
      %p81 = por %p79, %p80
      %p82 = scmp.ne.s32.totalorder %s73, %s74
      %p83 = scmp.eq.s32.totalorder %s21, 0
      %p84 = por %p82, %p83
      %p85 = scmp.ne.s32.totalorder %s73, %s74
      %p86 = scmp.eq.s32.totalorder %s22, 1
      %p87 = por %p85, %p86
      %p89 = scmp.ne.s32.totalorder %s74, %s88
      %p90 = scmp.eq.s32.totalorder %s22, 0
      %p91 = por %p89, %p90
      %s92 = ssub.s32 %s16, %s23
      %p93 = scmp.eq.s32.totalorder %s92, 0
      %s95 = sadd.s32 %s94, 1
      %s96 = scalar_select %p93, %s94, %s95
      %p99 = pneg %p93
      %p100 = scmp.eq.s32.totalorder %s16, 1
      %p101 = por %p99, %p100
      %p102 = scmp.ne.s32.totalorder %s94, %s97
      %p103 = scmp.eq.s32.totalorder %s16, 0
      %p104 = por %p102, %p103
      %p105 = scmp.ne.s32.totalorder %s94, %s97
      %p106 = scmp.eq.s32.totalorder %s21, 1
      %p107 = por %p105, %p106
      %p108 = scmp.ne.s32.totalorder %s97, %s98
      %p109 = scmp.eq.s32.totalorder %s21, 0
      %p110 = por %p108, %p109
      %p111 = scmp.ne.s32.totalorder %s97, %s98
      %p112 = scmp.eq.s32.totalorder %s22, 1
      %p113 = por %p111, %p112
      %p115 = scmp.ne.s32.totalorder %s98, %s114
      %p116 = scmp.eq.s32.totalorder %s22, 0
      %p117 = por %p115, %p116
      %p118 = scmp.le.s32.totalorder 1, %s16
      %p119 = scmp.lt.s32.totalorder %s16, 3
      %p120 = pnand %p118, %p119
      %p121 = pneg %p120
      // Predicated region
      $region9: #{tpu_custom_call.1} parent=5 // pred_check
        _
      $region10: #{tpu_custom_call.1} parent=5 // pred_check_branch
        %123 = sbr.rel (%p120) target = $region12
      $region11: #{tpu_custom_call.1} parent=5 // pred_region
        %s124 = ssub.s32 %s16, 1
        // Predicated region
        $region13: #{tpu_custom_call.1} parent=11 // pred_check
          %p125 = pneg %p63
        $region14: #{tpu_custom_call.1} parent=11 // pred_check_branch
          %127 = sbr.rel (%p125) target = $region16
        $region15: #{tpu_custom_call.1} parent=11 // pred_region
          %s129 = ssub.s32 512, 512
          %130 = vsyncadd [#allocation8], %s129
          %s131 = sshll.u32 [#allocation7], 4
          %s132 = int_to_ptr.vmem [resolvable:$true] %s131
          %137 = dma.hbm_to_vmem [thread:$0]  %s1, 512, %s132, [#allocation8], 128, 128, 8
        $region16: #{tpu_custom_call.1} parent=11 // pred_fallthru
          _
        // Predicated region
        $region17: #{tpu_custom_call.1} parent=11 // pred_check
          %p138 = pneg %p84
        $region18: #{tpu_custom_call.1} parent=11 // pred_check_branch
          %140 = sbr.rel (%p138) target = $region20
        $region19: #{tpu_custom_call.1} parent=11 // pred_region
          %s142 = ssub.s32 32, 32
          %143 = vsyncadd [#allocation8], %s142
          %s145 = sshll.u32 [#allocation9], 4
          %s146 = int_to_ptr.vmem [resolvable:$true] %s145
          %148 = dma.hbm_to_vmem [thread:$0]  %s2, 32, %s146, [#allocation8]
        $region20: #{tpu_custom_call.1} parent=11 // pred_fallthru
          _
      $region12: #{tpu_custom_call.1} parent=5 // pred_fallthru
        _
      %p149 = scmp.lt.s32.totalorder %s16, 2
      // Predicated region
      $region21: #{tpu_custom_call.1} parent=5 // pred_check
        %p150 = pneg %p149
      $region22: #{tpu_custom_call.1} parent=5 // pred_check_branch
        %152 = sbr.rel (%p150) target = $region24
      $region23: #{tpu_custom_call.1} parent=5 // pred_region
        // Predicated region
        $region25: #{tpu_custom_call.1} parent=23 // pred_check
          %p153 = pneg %p36
        $region26: #{tpu_custom_call.1} parent=23 // pred_check_branch
          %155 = sbr.rel (%p153) target = $region28
        $region27: #{tpu_custom_call.1} parent=23 // pred_region
          %s156 = sand.u32 %s26, 1
          %s157 = scalar_lea.sflag [#allocation5], %s156
          %s158 = sand.u32 %s26, 1
          %s159 = smul.addr %s158, 8
          %s160 = scalar_lea.vmem [#allocation4], %s159
          %s161 = smul.u32 4, %s16
          %s163 = ssub.s32 128, 128
          %164 = vsyncadd %s157, %s163
          %s165 = smul.addr %s161, 32
          %s166 = scalar_lea.hbm %s0, %s165
          %s167 = sshll.u32 %s160, 4
          %s168 = int_to_ptr.vmem [resolvable:$true] %s167
          %173 = dma.hbm_to_vmem [thread:$0]  %s166, 128, %s168, %s157, 32, 32, 2
        $region28: #{tpu_custom_call.1} parent=23 // pred_fallthru
          _
      $region24: #{tpu_custom_call.1} parent=5 // pred_fallthru
        _
      %p174 = scmp.le.s32.totalorder 1, %s16
      %p175 = scmp.lt.s32.totalorder %s16, 3
      %p176 = pnand %p174, %p175
      %p177 = pneg %p176
      // Predicated region
      $region29: #{tpu_custom_call.1} parent=5 // pred_check
        _
      $region30: #{tpu_custom_call.1} parent=5 // pred_check_branch
        %179 = sbr.rel (%p176) target = $region32
      $region31: #{tpu_custom_call.1} parent=5 // pred_region
        %s180 = ssub.s32 %s16, 1
        %s181 = sand.u32 %s29, 1
        %s182 = scalar_lea.sflag [#allocation5], %s181
        %s183 = sand.u32 %s29, 1
        %s184 = smul.addr %s183, 8
        %s185 = scalar_lea.vmem [#allocation4], %s184
        // Predicated region
        $region33: #{tpu_custom_call.1} parent=31 // pred_check
          %p186 = pneg %p42
        $region34: #{tpu_custom_call.1} parent=31 // pred_check_branch
          %188 = sbr.rel (%p186) target = $region36
        $region35: #{tpu_custom_call.1} parent=31 // pred_region
          %189 = dma.done %s182, 128
        $region36: #{tpu_custom_call.1} parent=31 // pred_fallthru
          _
        // Predicated region
        $region37: #{tpu_custom_call.1} parent=31 // pred_check
          %p190 = pneg %p63
        $region38: #{tpu_custom_call.1} parent=31 // pred_check_branch
          %192 = sbr.rel (%p190) target = $region40
        $region39: #{tpu_custom_call.1} parent=31 // pred_region
          %193 = dma.done [#allocation8], 512
        $region40: #{tpu_custom_call.1} parent=31 // pred_fallthru
          _
        // Predicated region
        $region41: #{tpu_custom_call.1} parent=31 // pred_check
          %p194 = pneg %p84
        $region42: #{tpu_custom_call.1} parent=31 // pred_check_branch
          %196 = sbr.rel (%p194) target = $region44
        $region43: #{tpu_custom_call.1} parent=31 // pred_region
          %197 = dma.done [#allocation8], 32
        $region44: #{tpu_custom_call.1} parent=31 // pred_fallthru
          _
        %s198 = sand.u32 %s29, 1
        %s199 = scalar_lea.sflag [#allocation5], %s198
        %s200 = sand.u32 %s29, 1
        %s201 = smul.addr %s200, 8
        %s202 = scalar_lea.vmem [#allocation4], %s201
        %p203 = pneg %p42
        %p204 = pneg %p39
        %p205 = pneg %p63
        %p206 = pneg %p60
        %p207 = pneg %p84
        %p208 = pneg %p81
        %p209 = pneg %p110
        %p210 = pneg %p107
        %s211 = sand.u32 %s97, 1
        %s212 = scalar_lea.sflag [#allocation6], %s211
        %s213 = sand.u32 %s97, 1
        %s214 = smul.addr %s213, 8
        %s215 = scalar_lea.vmem [#allocation10], %s214
        %s216 = smul.u32 4, %s21
        %s217 = smul.u32 4, %s21
        %p218 = scmp.eq.s32.totalorder %s21, 0
        // Predicated region
        $region45: #{tpu_custom_call.1} parent=31 // pred_check
          %p219 = pneg %p218
        $region46: #{tpu_custom_call.1} parent=31 // pred_check_branch
          %221 = sbr.rel (%p219) target = $region48
        $region47: #{tpu_custom_call.1} parent=31 // pred_region
          %v222 = vld [vmem:[#allocation9] sm:$0x3]
          %vm223 = vcmask 254976
          %224 = vst.msk [vmem:[#allocation2] sm:$0x3] %vm223, %v222
          %225 = vst.msk [vmem:[#allocation3] sm:$0x3] %vm223, 0.0
        $region48: #{tpu_custom_call.1} parent=31 // pred_fallthru
          _
        %v226 = vld [vmem:[#allocation7] sm:$0xff]
        %v227 = vld [vmem:[#allocation7 + $0x8] sm:$0xff]
        %v228 = vld [vmem:[#allocation7 + $0x10] sm:$0xff]
        %v229 = vld [vmem:[#allocation7 + $0x18] sm:$0xff]
        %v230 = vld [vmem:[#allocation2] sm:$0x3]
        %v231 = vld [vmem:[#allocation3] sm:$0x3]
        %v232 = vld [vmem:[%s185] sm:$0x3]
        %vm233 = vcmask 261120
        %v235 = vsel %vm233, %v230, 0
        %237 = vmatprep.subr.mxu0 0.0
        %238 = vmatpush1.msra.mxu0 %v226
        %239 = vmatprep.subr.mxu0 0.0
        %240 = vmatpush1.msra.mxu0 %v227
        %241 = vmatprep.subr.mxu0 0.0
        %242 = vmatpush1.msra.mxu0 %v228
        %243 = vmatprep.subr.mxu0 0.0
        %244 = vmatpush1.msra.mxu0 %v229
        %245 = vmatprep.subr.mxu0 0.0
        %246 = vmatpush1.msra.mxu0 0.0
        %247 = vmatprep.subr.mxu0 0.0
        %248 = vmatpush1.msra.mxu0 0.0
        %249 = vmatprep.subr.mxu0 0.0
        %250 = vmatpush1.msra.mxu0 0.0
        %251 = vmatprep.subr.mxu0 0.0
        %252 = vmatpush1.msra.mxu0 0.0
        %253 = vmatprep.subr.mxu0 0.0
        %254 = vmatpush1.msra.mxu0 0.0
        %255 = vmatprep.subr.mxu0 0.0
        %256 = vmatpush1.msra.mxu0 0.0
        %257 = vmatprep.subr.mxu0 0.0
        %258 = vmatpush1.msra.mxu0 0.0
        %259 = vmatprep.subr.mxu0 0.0
        %260 = vmatpush1.msra.mxu0 0.0
        %261 = vmatprep.subr.mxu0 0.0
        %262 = vmatpush1.msra.mxu0 0.0
        %263 = vmatprep.subr.mxu0 0.0
        %264 = vmatpush1.msra.mxu0 0.0
        %265 = vmatprep.subr.mxu0 0.0
        %266 = vmatpush1.msra.mxu0 0.0
        %267 = vmatprep.subr.mxu0 0.0
        %268 = vmatpush1.msra.mxu0 0.0
        %269 = vmatprep.subr.mxu0 0.0
        %270 = vmatpush1.msra.mxu0 0.0
        %271 = vmatprep.subr.mxu0 0.0
        %272 = vmatpush1.msra.mxu0 0.0
        %273 = vmatprep.subr.mxu0 0.0
        %274 = vmatpush1.msra.mxu0 0.0
        %275 = vmatprep.subr.mxu0 0.0
        %276 = vmatpush1.msra.mxu0 0.0
        %277 = vmatprep.subr.mxu0 0.0
        %278 = vmatpush1.msra.mxu0 0.0
        %279 = vmatprep.subr.mxu0 0.0
        %280 = vmatpush1.msra.mxu0 0.0
        %281 = vmatprep.subr.mxu0 0.0
        %282 = vmatpush1.msra.mxu0 0.0
        %283 = vmatprep.subr.mxu0 0.0
        %284 = vmatpush1.msra.mxu0 0.0
        %285 = vmatprep.subr.mxu0 0.0
        %286 = vmatpush1.msra.mxu0 0.0
        %287 = vmatprep.subr.mxu0 0.0
        %288 = vmatpush1.msra.mxu0 0.0
        %289 = vmatprep.subr.mxu0 0.0
        %290 = vmatpush1.msra.mxu0 0.0
        %291 = vmatprep.subr.mxu0 0.0
        %292 = vmatpush1.msra.mxu0 0.0
        %293 = vmatprep.subr.mxu0 0.0
        %294 = vmatpush1.msra.mxu0 0.0
        %295 = vmatprep.subr.mxu0 0.0
        %296 = vmatpush1.msra.mxu0 0.0
        %297 = vmatprep.subr.mxu0 0.0
        %298 = vmatpush1.msra.mxu0 0.0
        %299 = vmatprep.subr.mxu0 0.0
        %300 = vmatpush1.msra.mxu0 0.0
        %301 = vmatprep.mubr.f32.mxu0 0.0
        %302 = vmatmul.mubr.f32.gmra.mrb[0].mxu0 %v235
        %v303 = vpop.f32.mrb[0].mxu0
        %v304 = vadd.f32 0.0, %v303
        %v305 = vpop.f32.mrb[0].mxu0
        %306 = vdwg.mxu0
        %v307 = vadd.f32 %v232, %v304
        %v308 = vxor.u32 %v307, 2147483648
        %v309 = vmul.f32 %v308, 1.442695
        %v310 = vpow.pop %v309
        %v311 = vadd.f32 %v310, 1.0
        %v312 = vrcp.pop %v311
        %v313 = vmul.f32 1.0, %v312
        %v314 = vtanh.pop %v307
        %316 = vrot.lane.b32.xlu0 %v231, 32
        %v317 = vpop.permute.xlu0 %316
        %v319 = vmul.f32 %v313, %v317
        %321 = vrot.lane.b32.xlu0 %v314, 64
        %v322 = vpop.permute.xlu0 %321
        %v324 = vmul.f32 %v313, %v322
        %326 = vrot.lane.b32.xlu0 %v324, 32
        %v327 = vpop.permute.xlu0 %326
        %v329 = vadd.f32 %v319, %v327
        %v330 = vtanh.pop %v329
        %332 = vrot.lane.b32.xlu0 %v330, 64
        %v333 = vpop.permute.xlu0 %332
        %v335 = vmul.f32 %v313, %v333
        %337 = vrot.lane.b32.xlu0 %v335, 32
        %v338 = vpop.permute.xlu0 %337
        %vm340 = vcmask 254976
        %341 = vst.msk [vmem:[%s215] sm:$0x3] %vm340, %v338
        %s342 = scalar_lea.vmem %s185, 2 [#allocation4]
        %v343 = vld [vmem:[%s342] sm:$0x3]
        %v344 = vsel %vm233, %v338, 0
        %346 = vmatprep.subr.mxu0 0.0
        %347 = vmatpush1.msra.mxu0 %v226
        %348 = vmatprep.subr.mxu0 0.0
        %349 = vmatpush1.msra.mxu0 %v227
        %350 = vmatprep.subr.mxu0 0.0
        %351 = vmatpush1.msra.mxu0 %v228
        %352 = vmatprep.subr.mxu0 0.0
        %353 = vmatpush1.msra.mxu0 %v229
        %354 = vmatprep.subr.mxu0 0.0
        %355 = vmatpush1.msra.mxu0 0.0
        %356 = vmatprep.subr.mxu0 0.0
        %357 = vmatpush1.msra.mxu0 0.0
        %358 = vmatprep.subr.mxu0 0.0
        %359 = vmatpush1.msra.mxu0 0.0
        %360 = vmatprep.subr.mxu0 0.0
        %361 = vmatpush1.msra.mxu0 0.0
        %362 = vmatprep.subr.mxu0 0.0
        %363 = vmatpush1.msra.mxu0 0.0
        %364 = vmatprep.subr.mxu0 0.0
        %365 = vmatpush1.msra.mxu0 0.0
        %366 = vmatprep.subr.mxu0 0.0
        %367 = vmatpush1.msra.mxu0 0.0
        %368 = vmatprep.subr.mxu0 0.0
        %369 = vmatpush1.msra.mxu0 0.0
        %370 = vmatprep.subr.mxu0 0.0
        %371 = vmatpush1.msra.mxu0 0.0
        %372 = vmatprep.subr.mxu0 0.0
        %373 = vmatpush1.msra.mxu0 0.0
        %374 = vmatprep.subr.mxu0 0.0
        %375 = vmatpush1.msra.mxu0 0.0
        %376 = vmatprep.subr.mxu0 0.0
        %377 = vmatpush1.msra.mxu0 0.0
        %378 = vmatprep.subr.mxu0 0.0
        %379 = vmatpush1.msra.mxu0 0.0
        %380 = vmatprep.subr.mxu0 0.0
        %381 = vmatpush1.msra.mxu0 0.0
        %382 = vmatprep.subr.mxu0 0.0
        %383 = vmatpush1.msra.mxu0 0.0
        %384 = vmatprep.subr.mxu0 0.0
        %385 = vmatpush1.msra.mxu0 0.0
        %386 = vmatprep.subr.mxu0 0.0
        %387 = vmatpush1.msra.mxu0 0.0
        %388 = vmatprep.subr.mxu0 0.0
        %389 = vmatpush1.msra.mxu0 0.0
        %390 = vmatprep.subr.mxu0 0.0
        %391 = vmatpush1.msra.mxu0 0.0
        %392 = vmatprep.subr.mxu0 0.0
        %393 = vmatpush1.msra.mxu0 0.0
        %394 = vmatprep.subr.mxu0 0.0
        %395 = vmatpush1.msra.mxu0 0.0
        %396 = vmatprep.subr.mxu0 0.0
        %397 = vmatpush1.msra.mxu0 0.0
        %398 = vmatprep.subr.mxu0 0.0
        %399 = vmatpush1.msra.mxu0 0.0
        %400 = vmatprep.subr.mxu0 0.0
        %401 = vmatpush1.msra.mxu0 0.0
        %402 = vmatprep.subr.mxu0 0.0
        %403 = vmatpush1.msra.mxu0 0.0
        %404 = vmatprep.subr.mxu0 0.0
        %405 = vmatpush1.msra.mxu0 0.0
        %406 = vmatprep.subr.mxu0 0.0
        %407 = vmatpush1.msra.mxu0 0.0
        %408 = vmatprep.subr.mxu0 0.0
        %409 = vmatpush1.msra.mxu0 0.0
        %410 = vmatprep.mubr.f32.mxu0 0.0
        %411 = vmatmul.mubr.f32.gmra.mrb[0].mxu0 %v344
        %v412 = vpop.f32.mrb[0].mxu0
        %v413 = vadd.f32 0.0, %v412
        %v414 = vpop.f32.mrb[0].mxu0
        %415 = vdwg.mxu0
        %v416 = vadd.f32 %v343, %v413
        %v417 = vxor.u32 %v416, 2147483648
        %v418 = vmul.f32 %v417, 1.442695
        %v419 = vpow.pop %v418
        %v420 = vadd.f32 %v419, 1.0
        %v421 = vrcp.pop %v420
        %v422 = vmul.f32 1.0, %v421
        %v423 = vtanh.pop %v416
        %v424 = vmul.f32 %v422, %v329
        %426 = vrot.lane.b32.xlu0 %v423, 64
        %v427 = vpop.permute.xlu0 %426
        %v429 = vmul.f32 %v422, %v427
        %431 = vrot.lane.b32.xlu0 %v429, 32
        %v432 = vpop.permute.xlu0 %431
        %v434 = vadd.f32 %v424, %v432
        %v435 = vtanh.pop %v434
        %437 = vrot.lane.b32.xlu0 %v435, 64
        %v438 = vpop.permute.xlu0 %437
        %v440 = vmul.f32 %v422, %v438
        %442 = vrot.lane.b32.xlu0 %v440, 32
        %v443 = vpop.permute.xlu0 %442
        %s445 = scalar_lea.vmem %s215, 2 [#allocation10]
        %446 = vst.msk [vmem:[%s445] sm:$0x3] %vm340, %v443
        %s447 = scalar_lea.vmem %s185, 4 [#allocation4]
        %v448 = vld [vmem:[%s447] sm:$0x3]
        %v449 = vsel %vm233, %v443, 0
        %451 = vmatprep.subr.mxu0 0.0
        %452 = vmatpush1.msra.mxu0 %v226
        %453 = vmatprep.subr.mxu0 0.0
        %454 = vmatpush1.msra.mxu0 %v227
        %455 = vmatprep.subr.mxu0 0.0
        %456 = vmatpush1.msra.mxu0 %v228
        %457 = vmatprep.subr.mxu0 0.0
        %458 = vmatpush1.msra.mxu0 %v229
        %459 = vmatprep.subr.mxu0 0.0
        %460 = vmatpush1.msra.mxu0 0.0
        %461 = vmatprep.subr.mxu0 0.0
        %462 = vmatpush1.msra.mxu0 0.0
        %463 = vmatprep.subr.mxu0 0.0
        %464 = vmatpush1.msra.mxu0 0.0
        %465 = vmatprep.subr.mxu0 0.0
        %466 = vmatpush1.msra.mxu0 0.0
        %467 = vmatprep.subr.mxu0 0.0
        %468 = vmatpush1.msra.mxu0 0.0
        %469 = vmatprep.subr.mxu0 0.0
        %470 = vmatpush1.msra.mxu0 0.0
        %471 = vmatprep.subr.mxu0 0.0
        %472 = vmatpush1.msra.mxu0 0.0
        %473 = vmatprep.subr.mxu0 0.0
        %474 = vmatpush1.msra.mxu0 0.0
        %475 = vmatprep.subr.mxu0 0.0
        %476 = vmatpush1.msra.mxu0 0.0
        %477 = vmatprep.subr.mxu0 0.0
        %478 = vmatpush1.msra.mxu0 0.0
        %479 = vmatprep.subr.mxu0 0.0
        %480 = vmatpush1.msra.mxu0 0.0
        %481 = vmatprep.subr.mxu0 0.0
        %482 = vmatpush1.msra.mxu0 0.0
        %483 = vmatprep.subr.mxu0 0.0
        %484 = vmatpush1.msra.mxu0 0.0
        %485 = vmatprep.subr.mxu0 0.0
        %486 = vmatpush1.msra.mxu0 0.0
        %487 = vmatprep.subr.mxu0 0.0
        %488 = vmatpush1.msra.mxu0 0.0
        %489 = vmatprep.subr.mxu0 0.0
        %490 = vmatpush1.msra.mxu0 0.0
        %491 = vmatprep.subr.mxu0 0.0
        %492 = vmatpush1.msra.mxu0 0.0
        %493 = vmatprep.subr.mxu0 0.0
        %494 = vmatpush1.msra.mxu0 0.0
        %495 = vmatprep.subr.mxu0 0.0
        %496 = vmatpush1.msra.mxu0 0.0
        %497 = vmatprep.subr.mxu0 0.0
        %498 = vmatpush1.msra.mxu0 0.0
        %499 = vmatprep.subr.mxu0 0.0
        %500 = vmatpush1.msra.mxu0 0.0
        %501 = vmatprep.subr.mxu0 0.0
        %502 = vmatpush1.msra.mxu0 0.0
        %503 = vmatprep.subr.mxu0 0.0
        %504 = vmatpush1.msra.mxu0 0.0
        %505 = vmatprep.subr.mxu0 0.0
        %506 = vmatpush1.msra.mxu0 0.0
        %507 = vmatprep.subr.mxu0 0.0
        %508 = vmatpush1.msra.mxu0 0.0
        %509 = vmatprep.subr.mxu0 0.0
        %510 = vmatpush1.msra.mxu0 0.0
        %511 = vmatprep.subr.mxu0 0.0
        %512 = vmatpush1.msra.mxu0 0.0
        %513 = vmatprep.subr.mxu0 0.0
        %514 = vmatpush1.msra.mxu0 0.0
        %515 = vmatprep.mubr.f32.mxu0 0.0
        %516 = vmatmul.mubr.f32.gmra.mrb[0].mxu0 %v449
        %v517 = vpop.f32.mrb[0].mxu0
        %v518 = vadd.f32 0.0, %v517
        %v519 = vpop.f32.mrb[0].mxu0
        %520 = vdwg.mxu0
        %v521 = vadd.f32 %v448, %v518
        %v522 = vxor.u32 %v521, 2147483648
        %v523 = vmul.f32 %v522, 1.442695
        %v524 = vpow.pop %v523
        %v525 = vadd.f32 %v524, 1.0
        %v526 = vrcp.pop %v525
        %v527 = vmul.f32 1.0, %v526
        %v528 = vtanh.pop %v521
        %v529 = vmul.f32 %v527, %v434
        %531 = vrot.lane.b32.xlu0 %v528, 64
        %v532 = vpop.permute.xlu0 %531
        %v534 = vmul.f32 %v527, %v532
        %536 = vrot.lane.b32.xlu0 %v534, 32
        %v537 = vpop.permute.xlu0 %536
        %v539 = vadd.f32 %v529, %v537
        %v540 = vtanh.pop %v539
        %542 = vrot.lane.b32.xlu0 %v540, 64
        %v543 = vpop.permute.xlu0 %542
        %v545 = vmul.f32 %v527, %v543
        %547 = vrot.lane.b32.xlu0 %v545, 32
        %v548 = vpop.permute.xlu0 %547
        %s550 = scalar_lea.vmem %s215, 4 [#allocation10]
        %551 = vst.msk [vmem:[%s550] sm:$0x3] %vm340, %v548
        %s552 = scalar_lea.vmem %s185, 6 [#allocation4]
        %v553 = vld [vmem:[%s552] sm:$0x3]
        %v554 = vsel %vm233, %v548, 0
        %556 = vmatprep.subr.mxu0 0.0
        %557 = vmatpush1.msra.mxu0 %v226
        %558 = vmatprep.subr.mxu0 0.0
        %559 = vmatpush1.msra.mxu0 %v227
        %560 = vmatprep.subr.mxu0 0.0
        %561 = vmatpush1.msra.mxu0 %v228
        %562 = vmatprep.subr.mxu0 0.0
        %563 = vmatpush1.msra.mxu0 %v229
        %564 = vmatprep.subr.mxu0 0.0
        %565 = vmatpush1.msra.mxu0 0.0
        %566 = vmatprep.subr.mxu0 0.0
        %567 = vmatpush1.msra.mxu0 0.0
        %568 = vmatprep.subr.mxu0 0.0
        %569 = vmatpush1.msra.mxu0 0.0
        %570 = vmatprep.subr.mxu0 0.0
        %571 = vmatpush1.msra.mxu0 0.0
        %572 = vmatprep.subr.mxu0 0.0
        %573 = vmatpush1.msra.mxu0 0.0
        %574 = vmatprep.subr.mxu0 0.0
        %575 = vmatpush1.msra.mxu0 0.0
        %576 = vmatprep.subr.mxu0 0.0
        %577 = vmatpush1.msra.mxu0 0.0
        %578 = vmatprep.subr.mxu0 0.0
        %579 = vmatpush1.msra.mxu0 0.0
        %580 = vmatprep.subr.mxu0 0.0
        %581 = vmatpush1.msra.mxu0 0.0
        %582 = vmatprep.subr.mxu0 0.0
        %583 = vmatpush1.msra.mxu0 0.0
        %584 = vmatprep.subr.mxu0 0.0
        %585 = vmatpush1.msra.mxu0 0.0
        %586 = vmatprep.subr.mxu0 0.0
        %587 = vmatpush1.msra.mxu0 0.0
        %588 = vmatprep.subr.mxu0 0.0
        %589 = vmatpush1.msra.mxu0 0.0
        %590 = vmatprep.subr.mxu0 0.0
        %591 = vmatpush1.msra.mxu0 0.0
        %592 = vmatprep.subr.mxu0 0.0
        %593 = vmatpush1.msra.mxu0 0.0
        %594 = vmatprep.subr.mxu0 0.0
        %595 = vmatpush1.msra.mxu0 0.0
        %596 = vmatprep.subr.mxu0 0.0
        %597 = vmatpush1.msra.mxu0 0.0
        %598 = vmatprep.subr.mxu0 0.0
        %599 = vmatpush1.msra.mxu0 0.0
        %600 = vmatprep.subr.mxu0 0.0
        %601 = vmatpush1.msra.mxu0 0.0
        %602 = vmatprep.subr.mxu0 0.0
        %603 = vmatpush1.msra.mxu0 0.0
        %604 = vmatprep.subr.mxu0 0.0
        %605 = vmatpush1.msra.mxu0 0.0
        %606 = vmatprep.subr.mxu0 0.0
        %607 = vmatpush1.msra.mxu0 0.0
        %608 = vmatprep.subr.mxu0 0.0
        %609 = vmatpush1.msra.mxu0 0.0
        %610 = vmatprep.subr.mxu0 0.0
        %611 = vmatpush1.msra.mxu0 0.0
        %612 = vmatprep.subr.mxu0 0.0
        %613 = vmatpush1.msra.mxu0 0.0
        %614 = vmatprep.subr.mxu0 0.0
        %615 = vmatpush1.msra.mxu0 0.0
        %616 = vmatprep.subr.mxu0 0.0
        %617 = vmatpush1.msra.mxu0 0.0
        %618 = vmatprep.subr.mxu0 0.0
        %619 = vmatpush1.msra.mxu0 0.0
        %620 = vmatprep.mubr.f32.mxu0 0.0
        %621 = vmatmul.mubr.f32.gmra.mrb[0].mxu0 %v554
        %v622 = vpop.f32.mrb[0].mxu0
        %v623 = vadd.f32 0.0, %v622
        %v624 = vpop.f32.mrb[0].mxu0
        %625 = vdwg.mxu0
        %v626 = vadd.f32 %v553, %v623
        %v627 = vxor.u32 %v626, 2147483648
        %v628 = vmul.f32 %v627, 1.442695
        %v629 = vpow.pop %v628
        %v630 = vadd.f32 %v629, 1.0
        %v631 = vrcp.pop %v630
        %v632 = vmul.f32 1.0, %v631
        %v633 = vtanh.pop %v626
        %v634 = vmul.f32 %v632, %v539
        %636 = vrot.lane.b32.xlu0 %v633, 64
        %v637 = vpop.permute.xlu0 %636
        %v639 = vmul.f32 %v632, %v637
        %641 = vrot.lane.b32.xlu0 %v639, 32
        %v642 = vpop.permute.xlu0 %641
        %v644 = vadd.f32 %v634, %v642
        %v645 = vtanh.pop %v644
        %647 = vrot.lane.b32.xlu0 %v645, 64
        %v648 = vpop.permute.xlu0 %647
        %v650 = vmul.f32 %v632, %v648
        %652 = vrot.lane.b32.xlu0 %v650, 32
        %v653 = vpop.permute.xlu0 %652
        %s655 = scalar_lea.vmem %s215, 6 [#allocation10]
        %656 = vst.msk [vmem:[%s655] sm:$0x3] %vm340, %v653
        %657 = vst.msk [vmem:[#allocation2] sm:$0x3] %vm340, %v653
        %659 = vrot.lane.b32.xlu0 %v644, 96
        %v660 = vpop.permute.xlu0 %659
        %662 = vst.msk [vmem:[#allocation3] sm:$0x3] %vm340, %v660
        %s663 = sand.u32 %s97, 1
        %s664 = scalar_lea.sflag [#allocation6], %s663
        %s665 = sand.u32 %s97, 1
        %s666 = smul.addr %s665, 8
        %s667 = scalar_lea.vmem [#allocation10], %s666
        // Predicated region
        $region49: #{tpu_custom_call.1} parent=31 // pred_check
          %p668 = pneg %p107
        $region50: #{tpu_custom_call.1} parent=31 // pred_check_branch
          %670 = sbr.rel (%p668) target = $region52
        $region51: #{tpu_custom_call.1} parent=31 // pred_region
          %s671 = smul.u32 4, %s21
          %s673 = ssub.s32 128, 128
          %674 = vsyncadd %s664, %s673
          %s675 = smul.addr %s671, 32
          %s676 = scalar_lea.hbm %s3, %s675
          %s677 = sshll.u32 %s667, 4
          %s678 = int_to_ptr.vmem [resolvable:$true] %s677
          %683 = dma.vmem_to_hbm [thread:$0]  %s678, 128, %s676, %s664, 32, 32, 2
        $region52: #{tpu_custom_call.1} parent=31 // pred_fallthru
          _
      $region32: #{tpu_custom_call.1} parent=5 // pred_fallthru
        _
      %p684 = scmp.le.s32.totalorder 2, %s16
      // Predicated region
      $region53: #{tpu_custom_call.1} parent=5 // pred_check
        %p685 = pneg %p684
      $region54: #{tpu_custom_call.1} parent=5 // pred_check_branch
        %687 = sbr.rel (%p685) target = $region56
      $region55: #{tpu_custom_call.1} parent=5 // pred_region
        %s688 = ssub.s32 %s16, 2
        // Predicated region
        $region57: #{tpu_custom_call.1} parent=55 // pred_check
          %p689 = pneg %p113
        $region58: #{tpu_custom_call.1} parent=55 // pred_check_branch
          %691 = sbr.rel (%p689) target = $region60
        $region59: #{tpu_custom_call.1} parent=55 // pred_region
          %s692 = sand.u32 %s98, 1
          %s693 = scalar_lea.sflag [#allocation6], %s692
          %s694 = sand.u32 %s98, 1
          %s695 = smul.addr %s694, 8
          %s696 = scalar_lea.vmem [#allocation10], %s695
          %697 = dma.done %s693, 128
        $region60: #{tpu_custom_call.1} parent=55 // pred_fallthru
          _
      $region56: #{tpu_custom_call.1} parent=5 // pred_fallthru
        _
    $region6: #{tpu_custom_call.1} parent=1 // loop_footer
      %s20 = sadd.s32 1, %s16
    $region7: #{tpu_custom_call.1} parent=1 // loop_footer_branch
      %15 = sbr.rel target = $region3
    $region8: #{tpu_custom_call.1} parent=1 // loop_exit
      _
    %698 = vsyncpa [#allocation5], 1
    %s699 = scalar_lea.sflag [#allocation5], 1
    %700 = vsyncpa %s699, 1
    %701 = vsyncpa [#allocation8], 1
    %702 = vsyncpa [#allocation6], 1
    %s703 = scalar_lea.sflag [#allocation6], 1
    %704 = vsyncpa %s703, 1

</llo_original>
